<compile_context>
chip_gen: v6e
topology: v6e:2x2x1
jax: 0.10.0
libtpu: 0.0.40
codegen_flags: <defaults>
</compile_context>

<pallas_src>
import math

import jax
import jax.numpy as jnp
import numpy as np
from jax.experimental import pallas as pl
from jax.experimental.pallas import tpu as pltpu


def _make_label_smoothing_kernel(eps: float, pad_idx: int, vocab: int, vchunk: int):
    """Returns a kernel closed over the static hyper-parameters."""
    u = eps / (vocab - 1) if eps != 0.0 else 0.0
    # Entropy of the smoothed distribution of a non-pad row (trace-time constant):
    #   (1-eps)*log(1-eps) + (V-2)*u*log(u)   (pad column is 0, target column is 1-eps)
    h_const = 0.0
    if eps != 0.0:
        if (1.0 - eps) > 0.0:
            h_const += (1.0 - eps) * math.log(1.0 - eps)
        if u > 0.0 and vocab > 2:
            h_const += (vocab - 2) * u * math.log(u)

    assert vocab % vchunk == 0
    n_vchunks = vocab // vchunk

    def kernel(logits_ref, tgt_ref, out_ref, acc_ref):
        i = pl.program_id(1)                               # reduction step in this chunk

        @pl.when(i == 0)
        def _init():
            acc_ref[...] = jnp.zeros_like(acc_ref)

        t = tgt_ref[...]                                   # (TM, 1) int32
        tm = t.shape[0]

        # ---- single fused streaming pass over V (online logsumexp) ------------
        # carry = (m, s, x_t[, x_sum]); all (TM, 1) f32 row statistics.
        def update(carry, xc_raw, col_start):
            xc = xc_raw.astype(jnp.float32)                # chunk upcast stays chunk-local
            col = col_start + jax.lax.broadcasted_iota(jnp.int32, xc.shape, 1)
            m, s, x_t = carry[0], carry[1], carry[2]
            new_m = jnp.maximum(m, jnp.max(xc, axis=1, keepdims=True))
            s = s * jnp.exp(m - new_m) + jnp.sum(jnp.exp(xc - new_m), axis=1, keepdims=True)
            x_t = x_t + jnp.sum(jnp.where(col == t, xc, 0.0), axis=1, keepdims=True)
            if eps == 0.0:
                return (new_m, s, x_t)
            x_sum = carry[3] + jnp.sum(xc, axis=1, keepdims=True)
            return (new_m, s, x_t, x_sum)

        def body(j, carry):
            start = pl.multiple_of(j * vchunk, vchunk)     # 128-aligned lane chunk
            return update(carry, logits_ref[:, pl.ds(start, vchunk)], start)

        zeros = jnp.zeros((tm, 1), jnp.float32)
        carry = (jnp.full((tm, 1), -jnp.inf, jnp.float32), zeros, zeros)
        if eps != 0.0:
            carry = carry + (zeros,)

        if eps == 0.0:
            if n_vchunks == 1:
                carry = update(carry, logits_ref[...], 0)
            else:
                carry = jax.lax.fori_loop(0, n_vchunks, body, carry)
            m, s, x_t = carry
            x_p = None
            x_sum = None
        else:
            # pad_idx is static: peel the chunk holding the pad column and read that
            # column with a static in-register slice (no full-width masked reduce).
            pc = pad_idx // vchunk
            p_start = pc * vchunk
            xc_p = logits_ref[...] if n_vchunks == 1 else logits_ref[:, pl.ds(p_start, vchunk)]
            po = pad_idx - p_start
            x_p = xc_p[:, po:po + 1].astype(jnp.float32)   # (TM, 1)
            if n_vchunks == 1:
                carry = update(carry, xc_p, 0)
            else:
                carry = jax.lax.fori_loop(0, pc, body, carry)
                carry = update(carry, xc_p, p_start)
                carry = jax.lax.fori_loop(pc + 1, n_vchunks, body, carry)
            m, s, x_t, x_sum = carry

        lse = jnp.log(s) + m                               # (TM, 1)
        not_pad_row = (t != pad_idx).astype(jnp.float32)   # (TM, 1)

        if eps == 0.0:
            # CrossEntropyLoss(ignore_index=pad_idx, reduction='sum')
            row_loss = lse - x_t
        else:
            # KLDivLoss(reduction='sum')(log_softmax(x), smoothed_dist), algebraic form.
            # Note: (x_sum - vocab*lse) is a mild f32 cancellation; its error is scaled
            # by u = eps/(V-1) and is negligible for realistic V / logit magnitudes.
            cross = ((1.0 - eps) * (x_t - lse)
                     + u * ((x_sum - vocab * lse) - (x_t - lse) - (x_p - lse)))
            row_loss = h_const - cross

        # Pure VPU accumulate; no per-step cross-lane reduce / scalar store.
        acc_ref[...] += row_loss * not_pad_row

        @pl.when(i == pl.num_programs(1) - 1)
        def _finalize():
            total = jnp.sum(acc_ref[...])
            # Lane-dense store of this chunk's partial sum (wrapper reads [0,0]).
            out_ref[...] = jnp.full(out_ref.shape, total, dtype=out_ref.dtype)

    return kernel


def _round_up(x: int, m: int) -> int:
    return ((x + m - 1) // m) * m


def _tpu_vmem_capacity_bytes() -> int:
    """Best-effort VMEM capacity query; falls back to a v7x-conservative 64 MiB."""
    try:
        info = pltpu.get_tpu_info()
        for attr in ("vmem_capacity_bytes", "vmem_bytes", "vmem_size_bytes"):
            cap = getattr(info, attr, None)
            if cap:
                return int(cap)
    except Exception:
        pass
    return 64 << 20


def _default_num_chunks() -> int:
    """The leading 'parallel' row-chunk axis only pays off on 2-TensorCore chips (v7x)."""
    try:
        kind = jax.devices()[0].device_kind.lower()
    except Exception:
        return 1
    return 2 if "7" in kind else 1


def _choose_vchunk(vocab: int) -> int:
    """Lane-chunk width for the fused streaming pass over V."""
    if vocab <= 1024:
        return vocab
    for c in (1024, 512, 256, 128):
        if vocab % c == 0:
            return c
    # TODO(synk): vocab > 1024 that is not a 128-multiple falls back to a single
    # full-width pass; a V-axis grid split would bound this case properly.
    return vocab


def _choose_tm(n_rows: int, vocab: int, vchunk: int, sublane: int,
               itemsize: int, vmem_cap: int) -> int:
    """Largest row tile whose double-buffered logits block plus the fused-pass
    chunk temporaries stay inside a VMEM budget derived from the chip capacity."""
    budget = min(vmem_cap // 3, 40 << 20)          # ~21 MiB on v7x, 40 MiB on v5e/v6e
    per_row = 2 * vocab * itemsize + 8 * vchunk * 4
    max_tm = max(sublane, budget // per_row)
    tm = min(512, max_tm)
    tm = max(sublane, (tm // sublane) * sublane)
    return min(tm, _round_up(n_rows, sublane))


def label_smoothing_loss(x, t, *, trg_vocab_size, pad_idx, eps=0.0,
                         tm=None, num_chunks=None, vchunk=None):
    """x: (B, T, V) float logits, t: (B, T) int targets. Returns scalar loss."""
    B, T, V = x.shape
    assert V == trg_vocab_size, f"vocab size mismatch x: {V}, vocab: {trg_vocab_size}"
    assert t.ndim == 2, "t must be of size (B, T)"
    N = B * T

    itemsize = jnp.dtype(x.dtype).itemsize
    sublane = 16 if itemsize < 4 else 8
    vmem_cap = _tpu_vmem_capacity_bytes()

    if vchunk is None:
        vchunk = _choose_vchunk(V)
    assert V % vchunk == 0, "vchunk must divide the vocab size"
    assert vchunk == V or vchunk % 128 == 0, "chunked pass needs 128-lane-aligned chunks"

    if tm is None:
        tm = _choose_tm(N, V, vchunk, sublane, itemsize, vmem_cap)
    assert tm % sublane == 0, "tm must be a multiple of the sublane packing"

    n_tiles = -(-N // tm)
    nc = num_chunks if num_chunks is not None else _default_num_chunks()
    nc = max(1, min(nc, n_tiles))
    steps = -(-n_tiles // nc)
    n_pad = nc * steps * tm

    pred = x.reshape(N, V)                       # keep producer dtype (bf16 ok)
    tgt = t.reshape(N, 1).astype(jnp.int32)
    if n_pad != N:
        # Padded rows carry target=pad_idx -> masked to zero loss in the kernel.
        pred = jnp.pad(pred, ((0, n_pad - N), (0, 0)))
        tgt = jnp.pad(tgt, ((0, n_pad - N), (0, 0)), constant_values=pad_idx)

    kernel = _make_label_smoothing_kernel(float(eps), int(pad_idx), int(V), int(vchunk))

    # VMEM: double-buffered logits block + fused-pass chunk temporaries + slack,
    # capped per generation (v7x: 64 MiB/TC -> 48 MiB; v5e/v6e: 128 MiB -> 96 MiB).
    per_step = tm * (2 * V * itemsize + 8 * vchunk * 4) + (2 << 20)
    cap_limit = (96 << 20) if vmem_cap >= (100 << 20) else (48 << 20)
    vmem_limit = int(min(cap_limit, max(32 << 20, per_step)))

    out = pl.pallas_call(
        kernel,
        out_shape=jax.ShapeDtypeStruct((nc, 8, 128), jnp.float32),
        grid_spec=pltpu.PrefetchScalarGridSpec(
            num_scalar_prefetch=0,
            grid=(nc, steps),
            in_specs=[
                pl.BlockSpec((tm, V), lambda c, i: (c * steps + i, 0)),
                pl.BlockSpec((tm, 1), lambda c, i: (c * steps + i, 0)),
            ],
            out_specs=pl.BlockSpec((1, 8, 128), lambda c, i: (c, 0, 0)),
            scratch_shapes=[pltpu.VMEM((tm, 1), jnp.float32)],
        ),
        compiler_params=pltpu.CompilerParams(
            dimension_semantics=("parallel", "arbitrary"),
            vmem_limit_bytes=vmem_limit,
        ),
    )(pred, tgt)
    # Sum the per-chunk partial losses (one per TensorCore chunk).
    return jnp.sum(out[:, 0, 0])


def _reference_loss(x, t, *, trg_vocab_size, pad_idx, eps):
    """Pure-JAX reference matching the PyTorch module semantics."""
    V = trg_vocab_size
    pred = x.reshape(-1, V).astype(jnp.float32)
    tgt = t.reshape(-1)
    logp = jax.nn.log_softmax(pred, axis=1)
    delta = jax.nn.one_hot(tgt, V, dtype=jnp.float32)
    if eps == 0.0:
        nll = -jnp.sum(delta * logp, axis=1)
        return jnp.sum(jnp.where(tgt == pad_idx, 0.0, nll))
    q = (1.0 - eps) * delta + (1.0 - delta) * (eps / (V - 1))
    q = q.at[:, pad_idx].set(0.0)
    q = jnp.where((tgt == pad_idx)[:, None], 0.0, q)
    term = jnp.where(q > 0.0, q * (jnp.log(q) - logp), 0.0)
    return jnp.sum(term)


if __name__ == "__main__":
    # --- Test 1: small canonical shape, single-pass V ----------------------
    pad_idx = 0
    B, T, V = 2, 8, 32
    kx, kt = jax.random.split(jax.random.PRNGKey(0))
    x = jax.random.normal(kx, (B, T, V), dtype=jnp.float32)
    t = jax.random.randint(kt, (B, T), 0, V, dtype=jnp.int32)
    t = t.at[0, 0].set(pad_idx).at[1, 3].set(pad_idx)      # exercise pad-row masking

    for eps in (0.1, 0.0):
        got = label_smoothing_loss(x, t, trg_vocab_size=V, pad_idx=pad_idx, eps=eps)
        jax.block_until_ready(got)
        ref = _reference_loss(x, t, trg_vocab_size=V, pad_idx=pad_idx, eps=eps)
        np.testing.assert_allclose(np.asarray(got), np.asarray(ref),
                                   rtol=5e-5, atol=5e-4)

    # --- Test 2: ragged N -> tail padding, forced 2-chunk split, multi-step
    B2, T2, V2 = 2, 100, 160
    kx2, kt2 = jax.random.split(jax.random.PRNGKey(1))
    x2 = jax.random.normal(kx2, (B2, T2, V2), dtype=jnp.float32)
    t2 = jax.random.randint(kt2, (B2, T2), 0, V2, dtype=jnp.int32)
    t2 = t2.at[0, 5].set(pad_idx)

    for eps in (0.1, 0.0):
        got = label_smoothing_loss(x2, t2, trg_vocab_size=V2, pad_idx=pad_idx,
                                   eps=eps, tm=32, num_chunks=2)
        jax.block_until_ready(got)
        ref = _reference_loss(x2, t2, trg_vocab_size=V2, pad_idx=pad_idx, eps=eps)
        np.testing.assert_allclose(np.asarray(got), np.asarray(ref),
                                   rtol=5e-5, atol=5e-4)

    # --- Test 3: bf16 logits, chunked-V streaming pass, non-zero pad_idx ---
    B3, T3, V3 = 2, 16, 512
    kx3, kt3 = jax.random.split(jax.random.PRNGKey(2))
    x3 = jax.random.normal(kx3, (B3, T3, V3), dtype=jnp.bfloat16)
    t3 = jax.random.randint(kt3, (B3, T3), 0, V3, dtype=jnp.int32)

    for pad3 in (3, 200):           # pad column in the first / a middle lane chunk
        t3p = t3.at[0, 2].set(pad3).at[1, 7].set(pad3)
        for eps in (0.1, 0.0):
            got = label_smoothing_loss(x3, t3p, trg_vocab_size=V3, pad_idx=pad3,
                                       eps=eps, vchunk=128)
            jax.block_until_ready(got)
            ref = _reference_loss(x3, t3p, trg_vocab_size=V3, pad_idx=pad3, eps=eps)
            np.testing.assert_allclose(np.asarray(got), np.asarray(ref),
                                       rtol=1e-4, atol=1e-2)

    print("KERNEL_OK")
</pallas_src>

<mosaic_0001>
module attributes {stable_mosaic.version = 11 : i64} {
  func.func @kernel(%arg0: i32, %arg1: i32, %arg2: memref<16x32xf32, #tpu.memory_space<vmem>>, %arg3: memref<16x1xi32, #tpu.memory_space<vmem>>, %arg4: memref<1x8x128xf32, #tpu.memory_space<vmem>>, %arg5: memref<16x1xf32, #tpu.memory_space<vmem>>) attributes {dimension_semantics = [#tpu.dimension_semantics<parallel>, #tpu.dimension_semantics<arbitrary>], iteration_bounds = array<i64: 1, 1>, scalar_prefetch = 0 : i64, scratch_operands = 1 : i64, tpu.core_type = #tpu.core_type<tc>, window_params = [{transform_indices = @transform_0, window_bounds = array<i64: 16, 32>}, {transform_indices = @transform_1, window_bounds = array<i64: 16, 1>}, {transform_indices = @transform_2, window_bounds = array<i64: 1, 8, 128>}]} {
    %c0_i32 = arith.constant 0 : i32
    %0 = arith.cmpi eq, %arg1, %c0_i32 : i32
    %1 = arith.extui %0 : i1 to i32
    %c0_i32_0 = arith.constant 0 : i32
    %2 = arith.cmpi ne, %1, %c0_i32_0 : i32
    scf.if %2 {
      %cst_22 = arith.constant 0.000000e+00 : f32
      %61 = vector.broadcast %cst_22 : f32 to vector<16x1xf32>
      %c0_23 = arith.constant 0 : index
      %c0_24 = arith.constant 0 : index
      %62 = vector.load %arg5[%c0_23, %c0_24] : memref<16x1xf32, #tpu.memory_space<vmem>>, vector<16x1xf32>
      tpu.vector_store %arg5[%c0_23, %c0_24], %61 {strides = array<i32>} : memref<16x1xf32, #tpu.memory_space<vmem>>, vector<16x1xf32>,
    } else {
    }
    %c0 = arith.constant 0 : index
    %c0_1 = arith.constant 0 : index
    %3 = vector.load %arg3[%c0, %c0_1] : memref<16x1xi32, #tpu.memory_space<vmem>>, vector<16x1xi32>
    %cst = arith.constant 0.000000e+00 : f32
    %4 = vector.broadcast %cst : f32 to vector<16x1xf32>
    %cst_2 = arith.constant 0xFF800000 : f32
    %5 = vector.broadcast %cst_2 : f32 to vector<16x1xf32>
    %c0_3 = arith.constant 0 : index
    %c0_4 = arith.constant 0 : index
    %6 = vector.load %arg2[%c0_3, %c0_4] : memref<16x32xf32, #tpu.memory_space<vmem>>, vector<16x32xf32>
    %7 = vector.extract_strided_slice %6 {offsets = [0, 0], sizes = [16, 1], strides = [1, 1]} : vector<16x32xf32> to vector<16x1xf32>
    %8 = tpu.iota {dimensions = array<i32: 1>} : vector<16x32xi32>
    %c0_i32_5 = arith.constant 0 : i32
    %9 = vector.broadcast %c0_i32_5 : i32 to vector<16x32xi32>
    %10 = arith.addi %9, %8 : vector<16x32xi32>
    %cst_6 = arith.constant dense<0xFF800000> : vector<16xf32>
    %11 = vector.multi_reduction <maximumf>, %6, %cst_6 [1] : vector<16x32xf32> to vector<16xf32>
    %12 = vector.shape_cast %11 : vector<16xf32> to vector<16x1xf32>
    %13 = arith.maximumf %5, %12 : vector<16x1xf32>
    %14 = arith.subf %5, %13 : vector<16x1xf32>
    %15 = math.exp %14 : vector<16x1xf32>
    %16 = arith.mulf %4, %15 : vector<16x1xf32>
    %17 = vector.broadcast %13 : vector<16x1xf32> to vector<16x32xf32>
    %18 = arith.subf %6, %17 : vector<16x32xf32>
    %19 = math.exp %18 : vector<16x32xf32>
    %cst_7 = arith.constant dense<0.000000e+00> : vector<16xf32>
    %20 = vector.multi_reduction <add>, %19, %cst_7 [1] : vector<16x32xf32> to vector<16xf32>
    %21 = vector.shape_cast %20 : vector<16xf32> to vector<16x1xf32>
    %22 = arith.addf %16, %21 : vector<16x1xf32>
    %23 = vector.broadcast %3 : vector<16x1xi32> to vector<16x32xi32>
    %24 = arith.cmpi eq, %10, %23 : vector<16x32xi32>
    %cst_8 = arith.constant 0.000000e+00 : f32
    %25 = vector.broadcast %cst_8 : f32 to vector<16x32xf32>
    %26 = arith.select %24, %6, %25 : vector<16x32xi1>, vector<16x32xf32>
    %cst_9 = arith.constant dense<0.000000e+00> : vector<16xf32>
    %27 = vector.multi_reduction <add>, %26, %cst_9 [1] : vector<16x32xf32> to vector<16xf32>
    %28 = vector.shape_cast %27 : vector<16xf32> to vector<16x1xf32>
    %29 = arith.addf %4, %28 : vector<16x1xf32>
    %cst_10 = arith.constant dense<0.000000e+00> : vector<16xf32>
    %30 = vector.multi_reduction <add>, %6, %cst_10 [1] : vector<16x32xf32> to vector<16xf32>
    %31 = vector.shape_cast %30 : vector<16xf32> to vector<16x1xf32>
    %32 = arith.addf %4, %31 : vector<16x1xf32>
    %33 = math.log %22 : vector<16x1xf32>
    %34 = arith.addf %33, %13 : vector<16x1xf32>
    %c0_i32_11 = arith.constant 0 : i32
    %35 = vector.broadcast %c0_i32_11 : i32 to vector<16x1xi32>
    %36 = arith.cmpi ne, %3, %35 : vector<16x1xi32>
    %37 = arith.extui %36 : vector<16x1xi1> to vector<16x1xi32>
    %38 = arith.sitofp %37 : vector<16x1xi32> to vector<16x1xf32>
    %39 = arith.subf %29, %34 : vector<16x1xf32>
    %cst_12 = arith.constant 0.899999976 : f32
    %40 = vector.broadcast %cst_12 : f32 to vector<16x1xf32>
    %41 = arith.mulf %40, %39 : vector<16x1xf32>
    %cst_13 = arith.constant 3.200000e+01 : f32
    %42 = vector.broadcast %cst_13 : f32 to vector<16x1xf32>
    %43 = arith.mulf %42, %34 : vector<16x1xf32>
    %44 = arith.subf %32, %43 : vector<16x1xf32>
    %45 = arith.subf %29, %34 : vector<16x1xf32>
    %46 = arith.subf %44, %45 : vector<16x1xf32>
    %47 = arith.subf %7, %34 : vector<16x1xf32>
    %48 = arith.subf %46, %47 : vector<16x1xf32>
    %cst_14 = arith.constant 0.0032258064 : f32
    %49 = vector.broadcast %cst_14 : f32 to vector<16x1xf32>
    %50 = arith.mulf %49, %48 : vector<16x1xf32>
    %51 = arith.addf %41, %50 : vector<16x1xf32>
    %cst_15 = arith.constant -0.649976611 : f32
    %52 = vector.broadcast %cst_15 : f32 to vector<16x1xf32>
    %53 = arith.subf %52, %51 : vector<16x1xf32>
    %c0_16 = arith.constant 0 : index
    %c0_17 = arith.constant 0 : index
    %54 = vector.load %arg5[%c0_16, %c0_17] : memref<16x1xf32, #tpu.memory_space<vmem>>, vector<16x1xf32>
    %55 = arith.mulf %53, %38 : vector<16x1xf32>
    %56 = arith.addf %54, %55 : vector<16x1xf32>
    %c0_18 = arith.constant 0 : index
    %c0_19 = arith.constant 0 : index
    %57 = vector.load %arg5[%c0_18, %c0_19] : memref<16x1xf32, #tpu.memory_space<vmem>>, vector<16x1xf32>
    tpu.vector_store %arg5[%c0_18, %c0_19], %56 {strides = array<i32>} : memref<16x1xf32, #tpu.memory_space<vmem>>, vector<16x1xf32>,
    %c0_i32_20 = arith.constant 0 : i32
    %58 = arith.cmpi eq, %arg1, %c0_i32_20 : i32
    %59 = arith.extui %58 : i1 to i32
    %c0_i32_21 = arith.constant 0 : i32
    %60 = arith.cmpi ne, %59, %c0_i32_21 : i32
    scf.if %60 {
      %c0_22 = arith.constant 0 : index
      %c0_23 = arith.constant 0 : index
      %61 = vector.load %arg5[%c0_22, %c0_23] : memref<16x1xf32, #tpu.memory_space<vmem>>, vector<16x1xf32>
      %62 = vector.shape_cast %61 : vector<16x1xf32> to vector<1x16x1xf32>
      %cst_24 = arith.constant dense<0.000000e+00> : vector<1xf32>
      %63 = vector.multi_reduction <add>, %62, %cst_24 [1, 2] : vector<1x16x1xf32> to vector<1xf32>
      %64 = vector.shape_cast %63 : vector<1xf32> to vector<1x1x1xf32>
      %65 = vector.extract %64[0, 0, 0] : f32 from vector<1x1x1xf32>
      %66 = vector.broadcast %65 : f32 to vector<1x8x128xf32>
      %c0_25 = arith.constant 0 : index
      %c0_26 = arith.constant 0 : index
      %c0_27 = arith.constant 0 : index
      %67 = vector.load %arg4[%c0_25, %c0_26, %c0_27] : memref<1x8x128xf32, #tpu.memory_space<vmem>>, vector<1x8x128xf32>
      tpu.vector_store %arg4[%c0_25, %c0_26, %c0_27], %66 {strides = array<i32>} : memref<1x8x128xf32, #tpu.memory_space<vmem>>, vector<1x8x128xf32>,
    } else {
    }
    return
  }
  func.func @transform_0(%arg0: i32, %arg1: i32) -> (i32, i32) {
    %c1_i32 = arith.constant 1 : i32
    %0 = arith.muli %arg0, %c1_i32 : i32
    %1 = arith.addi %0, %arg1 : i32
    %c0_i32 = arith.constant 0 : i32
    %c0_i32_0 = arith.constant 0 : i32
    return %1, %c0_i32 : i32, i32
  }
  func.func @transform_1(%arg0: i32, %arg1: i32) -> (i32, i32) {
    %c1_i32 = arith.constant 1 : i32
    %0 = arith.muli %arg0, %c1_i32 : i32
    %1 = arith.addi %0, %arg1 : i32
    %c0_i32 = arith.constant 0 : i32
    %c0_i32_0 = arith.constant 0 : i32
    return %1, %c0_i32 : i32, i32
  }
  func.func @transform_2(%arg0: i32, %arg1: i32) -> (i32, i32, i32) {
    %c0_i32 = arith.constant 0 : i32
    %c0_i32_0 = arith.constant 0 : i32
    %c0_i32_1 = arith.constant 0 : i32
    return %arg0, %c0_i32, %c0_i32_0 : i32, i32, i32
  }
}

</mosaic_0001>

<llo_original>
// kernel: tpu_custom_call.1
$region0: #{tpu_custom_call.1}
  #allocation0 [shape = 'u32[]', space=smem, size = 0x4, offset = 0x4, fixed_abs, tag = 'smem constant byte address 0x4 - core index']
  #allocation1 [shape = 'u32[144,128]{1,0:T(1,128)}', space=vmem, size = 0x12000, scoped, tag = 'internal scratch']
  #allocation2 [shape = 'f32[16,1]{1,0:T(8,128)}', space=vmem, size = 0x2000, scoped, tag = 'scratch operand']
  %s0 = inlined_call_operand.vmem [shape: f32[16,32], index: 0, kind: input, shape index: {}]
  %s1 = inlined_call_operand.vmem [shape: s32[16,1], index: 1, kind: input, shape index: {}]
  %s2 = inlined_call_operand.hbm [shape: f32[1,8,128], index: 2, kind: output, shape index: {}]
  %s3 = sld [smem:[#allocation0]]
  $region26: #{tpu_custom_call.1} parent=0
    _
  %s5 = ssub.s32 1, %s3
  %s6 = scalar_select 0, %s5, %s3
  $region1: #{tpu_custom_call.1} parent=0
    #allocation3 [shape = 'u8[4096]{0}', space=vmem, size = 0x1000, scoped, tag = 'output window, operand 0, single buffered']
    #allocation4 [shape = 's32[1]{0}', space=sflag, size = 0x4, scoped, tag = 'scoped memory for tpu_custom_call.1']
    %7 = vsyncpa [#allocation4], 0
    // Predicated region
    $region2: #{tpu_custom_call.1} parent=1 // pred_check
      _
    $region3: #{tpu_custom_call.1} parent=1 // pred_check_branch
      %9 = sbr.rel (0) target = $region5
    $region4: #{tpu_custom_call.1} parent=1 // pred_region
      %s10 = sadd.s32 0, 0
      %s11 = smul.u32 2, %s10
      %p12 = scmp.lt.s32.totalorder %s11, 1
      %s13 = scalar_select %p12, %s11, 1
      %s14 = smul.addr %s13, 8
      %s15 = scalar_lea.vmem %s0, %s14
      %s16 = sadd.s32 0, 0
      %s17 = smul.u32 2, %s16
    $region5: #{tpu_custom_call.1} parent=1 // pred_fallthru
      _
    // Predicated region
    $region6: #{tpu_custom_call.1} parent=1 // pred_check
      _
    $region7: #{tpu_custom_call.1} parent=1 // pred_check_branch
      %19 = sbr.rel (0) target = $region9
    $region8: #{tpu_custom_call.1} parent=1 // pred_region
      %s20 = sadd.s32 0, 0
      %s21 = smul.u32 2, %s20
      %p22 = scmp.lt.s32.totalorder %s21, 1
      %s23 = scalar_select %p22, %s21, 1
      %s24 = smul.addr %s23, 8
      %s25 = scalar_lea.vmem %s1, %s24
      %s26 = sadd.s32 0, 0
      %s27 = smul.u32 2, %s26
    $region9: #{tpu_custom_call.1} parent=1 // pred_fallthru
      _
    %s28 = sadd.s32 0, 0
    %s29 = smul.u32 2, %s28
    %p30 = scmp.lt.s32.totalorder %s29, 1
    %s31 = scalar_select %p30, %s29, 1
    %s32 = smul.addr %s31, 8
    %s33 = scalar_lea.vmem %s0, %s32
    %s34 = sadd.s32 0, 0
    %s35 = smul.u32 2, %s34
    %p36 = scmp.lt.s32.totalorder %s35, 1
    %s37 = scalar_select %p36, %s35, 1
    %s38 = smul.addr %s37, 8
    %s39 = scalar_lea.vmem %s1, %s38
    %s40 = sadd.s32 0, 0
    %s41 = smul.u32 2, %s40
    %p42 = scmp.lt.s32.totalorder %s41, 1
    %s43 = scalar_select %p42, %s41, 1
    %s44 = smul.addr %s43, 8
    %s45 = scalar_lea.vmem %s0, %s44
    %s46 = sadd.s32 0, 0
    %s47 = smul.u32 2, %s46
    %s48 = sadd.s32 0, 0
    %s49 = smul.u32 2, %s48
    %p50 = scmp.lt.s32.totalorder %s49, 1
    %s51 = scalar_select %p50, %s49, 1
    %s52 = smul.addr %s51, 8
    %s53 = scalar_lea.vmem %s1, %s52
    %s54 = sadd.s32 0, 0
    %s55 = smul.u32 2, %s54
    %p56 = scmp.eq.s32.totalorder 0, 0
    // Predicated region
    $region10: #{tpu_custom_call.1} parent=1 // pred_check
      %p57 = pneg %p56
    $region11: #{tpu_custom_call.1} parent=1 // pred_check_branch
      %59 = sbr.rel (%p57) target = $region13
    $region12: #{tpu_custom_call.1} parent=1 // pred_region
      %vm60 = vcmask 7168
      %61 = vst.msk [vmem:[#allocation2] sm:$0xff] %vm60, 0.0
      %62 = vst.msk [vmem:[#allocation2 + $0x8] sm:$0xff] %vm60, 0.0
    $region13: #{tpu_custom_call.1} parent=1 // pred_fallthru
      _
    %v63 = vld [vmem:[%s53] sm:$0xff]
    %v64 = vld [vmem:[%s53 + $0x8] sm:$0xff]
    %v65 = vld [vmem:[%s45] sm:$0xff]
    %v66 = vld [vmem:[%s45 + $0x8] sm:$0xff]
    %v67 = vlaneseq
    %v68 = vand.u32 %v67, 127
    %vm69 = vcmask 261120
    %v70 = vsel %vm69, %v65, -inf
    %71 = vmax.xlane.f32.xlu0 %v70
    %v72 = vpop.xlane.xlu0 %71
    %v73 = vsel %vm69, %v66, -inf
    %74 = vmax.xlane.f32.xlu0 %v73
    %v75 = vpop.xlane.xlu0 %74
    %v76 = vsub.f32 -inf, %v72
    %v77 = vsub.f32 -inf, %v75
    %v78 = vmul.f32 %v76, 1.442695
    %v79 = vpow.pop %v78
    %v80 = vmul.f32 %v77, 1.442695
    %v81 = vpow.pop %v80
    %v82 = vmul.f32 %v79, 0.0
    %v83 = vmul.f32 %v81, 0.0
    %v84 = vsub.f32 %v65, %v72
    %v85 = vsub.f32 %v66, %v75
    %v86 = vmul.f32 %v84, 1.442695
    %v87 = vpow.pop %v86
    %v88 = vmul.f32 %v85, 1.442695
    %v89 = vpow.pop %v88
    %v90 = vsel %vm69, %v87, 0.0
    %91 = vadd.xlane.f32.xlu0 %v90
    %v92 = vpop.xlane.xlu0 %91
    %v93 = vsel %vm69, %v89, 0.0
    %94 = vadd.xlane.f32.xlu0 %v93
    %v95 = vpop.xlane.xlu0 %94
    %v96 = vadd.f32 %v82, %v92
    %v97 = vadd.f32 %v83, %v95
    %98 = vset.pattern.permute.xlu0 0
    %99 = vperm.xlu0 %98, %v63
    %v100 = vpop.permute.xlu0 %99
    %101 = vset.pattern.permute.xlu0 0
    %102 = vperm.xlu0 %101, %v64
    %v103 = vpop.permute.xlu0 %102
    %vm104 = vcmp.eq.s32.totalorder %v68, %v100
    %vm105 = vcmp.eq.s32.totalorder %v68, %v103
    %v106 = vsel %vm104, %v65, 0.0
    %v107 = vsel %vm105, %v66, 0.0
    %v108 = vsel %vm69, %v106, 0.0
    %109 = vadd.xlane.f32.xlu0 %v108
    %v110 = vpop.xlane.xlu0 %109
    %v111 = vsel %vm69, %v107, 0.0
    %112 = vadd.xlane.f32.xlu0 %v111
    %v113 = vpop.xlane.xlu0 %112
    %v114 = vadd.f32 %v110, 0.0
    %v115 = vadd.f32 %v113, 0.0
    %v116 = vsel %vm69, %v65, 0.0
    %117 = vadd.xlane.f32.xlu0 %v116
    %v118 = vpop.xlane.xlu0 %117
    %v119 = vsel %vm69, %v66, 0.0
    %120 = vadd.xlane.f32.xlu0 %v119
    %v121 = vpop.xlane.xlu0 %120
    %v122 = vadd.f32 %v118, 0.0
    %v123 = vadd.f32 %v121, 0.0
    %v124 = vlog2.pop %v96
    %v125 = vmul.f32 %v124, 0.6931472
    %v126 = vlog2.pop %v97
    %v127 = vmul.f32 %v126, 0.6931472
    %v128 = vadd.f32 %v125, %v72
    %v129 = vadd.f32 %v127, %v75
    %vm130 = vcmp.ne.s32.totalorder %v63, 0
    %vm131 = vcmp.ne.s32.totalorder %v64, 0
    %v132 = vsel %vm130, 1, 0
    %v133 = vsel %vm131, 1, 0
    %v134 = vcvt.s32.f32 %v132
    %v135 = vcvt.s32.f32 %v133
    %v136 = vsub.f32 %v114, %v128
    %v137 = vsub.f32 %v115, %v129
    %v138 = vmul.f32 %v136, 0.9
    %v139 = vmul.f32 %v137, 0.9
    %v140 = vmul.f32 %v128, 32.0
    %v141 = vmul.f32 %v129, 32.0
    %v142 = vsub.f32 %v122, %v140
    %v143 = vsub.f32 %v123, %v141
    %v144 = vsub.f32 %v142, %v136
    %v145 = vsub.f32 %v143, %v137
    %v146 = vsub.f32 %v65, %v128
    %v147 = vsub.f32 %v66, %v129
    %v148 = vsub.f32 %v144, %v146
    %v149 = vsub.f32 %v145, %v147
    %v150 = vmul.f32 %v148, 0.0032258064
    %v151 = vmul.f32 %v149, 0.0032258064
    %v152 = vadd.f32 %v138, %v150
    %v153 = vadd.f32 %v139, %v151
    %v154 = vsub.f32 -0.6499766, %v152
    %v155 = vsub.f32 -0.6499766, %v153
    %v156 = vld [vmem:[#allocation2] sm:$0xff]
    %v157 = vld [vmem:[#allocation2 + $0x8] sm:$0xff]
    %v158 = vmul.f32 %v154, %v134
    %v159 = vmul.f32 %v155, %v135
    %v160 = vadd.f32 %v156, %v158
    %v161 = vadd.f32 %v157, %v159
    %vm162 = vcmask 7168
    %163 = vst.msk [vmem:[#allocation2] sm:$0xff] %vm162, %v160
    %164 = vst.msk [vmem:[#allocation2 + $0x8] sm:$0xff] %vm162, %v161
    // Predicated region
    $region14: #{tpu_custom_call.1} parent=1 // pred_check
      %p165 = pneg %p56
    $region15: #{tpu_custom_call.1} parent=1 // pred_check_branch
      %167 = sbr.rel (%p165) target = $region17
    $region16: #{tpu_custom_call.1} parent=1 // pred_region
      %v168 = vld [vmem:[#allocation2] sm:$0xff]
      %v169 = vld [vmem:[#allocation2 + $0x8] sm:$0xff]
      %v170 = vsel %vm162, %v168, 0.0
      %v171 = vsel %vm162, %v169, 0.0
      %v172 = vadd.f32 %v170, %v171
      %173 = vadd.xlane.f32.xlu0 %v172
      %v174 = vpop.xlane.xlu0 %173
      %v175 = vrot.slane %v174, 4
      %v176 = vadd.f32 %v174, %v175
      %v177 = vrot.slane %v176, 2
      %v178 = vadd.f32 %v176, %v177
      %v179 = vrot.slane %v178, 1
      %v180 = vadd.f32 %v178, %v179
      %s181 = vtos %v180
      %v182 = vstv %s181
      %183 = vst [vmem:[#allocation3] sm:$0xff] %v182
    $region17: #{tpu_custom_call.1} parent=1 // pred_fallthru
      _
    // Predicated region
    $region18: #{tpu_custom_call.1} parent=1 // pred_check
      _
    $region19: #{tpu_custom_call.1} parent=1 // pred_check_branch
      %185 = sbr.rel (0) target = $region21
    $region20: #{tpu_custom_call.1} parent=1 // pred_region
      %s187 = ssub.s32 128, 128
      %188 = vsyncadd [#allocation4], %s187
      %s190 = sshll.u32 [#allocation3], 4
      %s191 = int_to_ptr.vmem [resolvable:$true] %s190
      %193 = dma.vmem_to_hbm [thread:$0]  %s191, 128, %s2, [#allocation4]
    $region21: #{tpu_custom_call.1} parent=1 // pred_fallthru
      _
    // Predicated region
    $region22: #{tpu_custom_call.1} parent=1 // pred_check
      _
    $region23: #{tpu_custom_call.1} parent=1 // pred_check_branch
      %195 = sbr.rel (0) target = $region25
    $region24: #{tpu_custom_call.1} parent=1 // pred_region
      %196 = dma.done [#allocation4], 128
    $region25: #{tpu_custom_call.1} parent=1 // pred_fallthru
      _
    %197 = vsyncpa [#allocation4], 1

</llo_original>
